<compile_context>
chip_gen: v7x
topology: tpu7x:2x2x1
jax: 0.10.0
libtpu: 0.0.40
codegen_flags: <defaults>
</compile_context>

<pallas_src>
import functools

import numpy as np
import jax
import jax.numpy as jnp
from jax import lax
from jax.experimental import pallas as pl
from jax.experimental.pallas import tpu as pltpu


def _u32(v):
    """Python int -> uint32 constant (wrapping)."""
    return jnp.uint32(v & 0xFFFFFFFF)


def _mix_u32(x):
    """Murmur3-style finalizer: uint32 -> well mixed uint32 bits."""
    x = x ^ (x >> 16)
    x = x * _u32(0x7FEB352D)
    x = x ^ (x >> 15)
    x = x * _u32(0x846CA68B)
    x = x ^ (x >> 16)
    return x


def _msd_kernel(seed_ref, x_ref, w_ref, b_ref, o_ref, *, rates, tile_b, hidden):
    """Multi-sample dropout + single fused linear classifier + mean.

    seed_ref : SMEM (1,) int32       -- scalar-prefetched PRNG seed
    x_ref    : VMEM (TB, H) f32      -- input tile (pipelined over batch)
    w_ref    : VMEM (H, C_pad) f32   -- classifier weight (transposed, resident)
    b_ref    : VMEM (1, C_pad) f32   -- classifier bias (lane padded)
    o_ref    : VMEM (TB, C_pad) f32  -- averaged logits tile
    """
    x = x_ref[...]
    tb, h = x.shape

    # Global element id, unique across batch tiles, mixed with the user seed.
    row = lax.broadcasted_iota(jnp.int32, (tb, h), 0) + pl.program_id(0) * tile_b
    col = lax.broadcasted_iota(jnp.int32, (tb, h), 1)
    gid = row * hidden + col                         # wraps for huge sizes; fine for hashing
    base = gid.astype(jnp.uint32) * _u32(0x9E3779B9) + seed_ref[0].astype(jnp.uint32)

    # Accumulate the combined dropout scale:  sum_i scale_i(elem),
    # scale_i = 1 (rate 0) | keep_i/(1-rate_i) | 0 (rate >= 1, torch zeroes input).
    scale = jnp.zeros(x.shape, jnp.float32)
    for s, rate in enumerate(rates):
        rate = float(rate)
        if rate <= 0.0:
            scale = scale + jnp.float32(1.0)
        elif rate >= 1.0:
            pass  # Dropout(p=1) zeroes everything -> contributes 0
        else:
            salt = _u32((s + 1) * 0x85EBCA6B)
            bits = _mix_u32(base ^ salt)
            # Integer-domain threshold test on the top 24 bits: keep iff u >= rate.
            thr = _u32(min(int(round(rate * (1 << 24))), (1 << 24) - 1))
            keep = (bits >> 8) >= thr
            scale = scale + jnp.where(keep,
                                      jnp.float32(1.0 / (1.0 - rate)),
                                      jnp.float32(0.0))

    inv_n = jnp.float32(1.0 / len(rates))
    xm = x * (scale * inv_n)

    # Single GEMM + single bias add (mean distributed through the linear head).
    o_ref[...] = (jnp.dot(xm, w_ref[...], preferred_element_type=jnp.float32)
                  + b_ref[...]).astype(o_ref.dtype)


def multi_sample_dropout(x, weight, bias, *, max_dropout_rate, num_samples,
                         seed=0, tile_b=None):
    """x: (B, H) f32; weight: (C, H) f32 (torch layout); bias: (C,) f32."""
    B, H = x.shape
    C = weight.shape[0]
    assert num_samples >= 1
    rates = tuple(float(r) for r in np.linspace(0.0, max_dropout_rate, num_samples))

    # Lane-pad the (tiny) class dimension to a multiple of 128 for dense stores.
    C_pad = ((C + 127) // 128) * 128
    w_t = jnp.zeros((H, C_pad), jnp.float32).at[:, :C].set(
        jnp.asarray(weight, jnp.float32).T)
    b2 = jnp.zeros((1, C_pad), jnp.float32).at[:, :C].set(
        jnp.asarray(bias, jnp.float32))

    # Batch tile: big enough to amortize per-step overhead, small enough that
    # the double-buffered x tile stays well inside every generation's VMEM
    # (<= ~8 MiB for the two x buffers; W stays resident).
    if tile_b is None:
        tile_b = min(B, 512)
        max_rows = max(8, (8 * 1024 * 1024) // (2 * H * 4))
        tile_b = min(tile_b, max_rows)
    if tile_b < B:
        tile_b = max(8, (tile_b // 8) * 8)   # sublane-aligned partial tiles
    else:
        tile_b = B
    grid = (pl.cdiv(B, tile_b),)

    seed_arr = jnp.array([seed], dtype=jnp.int32)
    kernel = functools.partial(_msd_kernel, rates=rates, tile_b=tile_b, hidden=H)

    out = pl.pallas_call(
        kernel,
        out_shape=jax.ShapeDtypeStruct((B, C_pad), jnp.float32),
        grid_spec=pltpu.PrefetchScalarGridSpec(
            num_scalar_prefetch=1,
            grid=grid,
            in_specs=[
                pl.BlockSpec((tile_b, H), lambda i, seed: (i, 0)),   # x (pipelined)
                pl.BlockSpec((H, C_pad), lambda i, seed: (0, 0)),    # W (resident)
                pl.BlockSpec((1, C_pad), lambda i, seed: (0, 0)),    # bias
            ],
            out_specs=pl.BlockSpec((tile_b, C_pad), lambda i, seed: (i, 0)),
        ),
        compiler_params=pltpu.CompilerParams(
            dimension_semantics=("parallel",),
        ),
    )(seed_arr, jnp.asarray(x, jnp.float32), w_t, b2)

    return out[:, :C]
    # TODO(synk): for very large H add a K-reduction grid axis ("arbitrary")
    # with a VMEM accumulator so the per-step x tile stays within v7x/v5e VMEM.


if __name__ == "__main__":
    # Small deterministic setup consistent with the module's forward:
    # x (batch, hidden), classifier = nn.Linear(hidden, num_classes).
    batch, hidden, num_classes = 16, 32, 8
    max_dropout_rate = 0.5
    num_samples = 4

    key = jax.random.PRNGKey(0)
    kx, kw, kb = jax.random.split(key, 3)
    x = jax.random.normal(kx, (batch, hidden), dtype=jnp.float32)
    weight = jax.random.normal(kw, (num_classes, hidden), dtype=jnp.float32) * 0.1
    bias = jax.random.normal(kb, (num_classes,), dtype=jnp.float32) * 0.1

    # Deterministic check: with max_dropout_rate=0 every sample is identity,
    # so the result must equal the plain linear head.
    out_nodrop = multi_sample_dropout(
        x, weight, bias, max_dropout_rate=0.0, num_samples=3, seed=0)
    ref = np.asarray(x) @ np.asarray(weight).T + np.asarray(bias)
    np.testing.assert_allclose(np.asarray(out_nodrop), ref, rtol=2e-2, atol=2e-2)

    # Actual multi-sample dropout forward.
    out = multi_sample_dropout(
        x, weight, bias,
        max_dropout_rate=max_dropout_rate,
        num_samples=num_samples,
        seed=0,
    )
    out = jax.block_until_ready(out)
    assert out.shape == (batch, num_classes)
    assert jnp.all(jnp.isfinite(out))
    print("KERNEL_OK")
</pallas_src>

<mosaic_0001>
module attributes {stable_mosaic.version = 11 : i64} {
  func.func @_msd_kernel(%arg0: i32, %arg1: memref<1xi32, #tpu.memory_space<smem>>, %arg2: memref<16x32xf32, #tpu.memory_space<vmem>>, %arg3: memref<32x128xf32, #tpu.memory_space<vmem>>, %arg4: memref<1x128xf32, #tpu.memory_space<vmem>>, %arg5: memref<16x128xf32, #tpu.memory_space<vmem>>) attributes {dimension_semantics = [#tpu.dimension_semantics<parallel>], iteration_bounds = array<i64: 1>, scalar_prefetch = 1 : i64, scratch_operands = 0 : i64, tpu.core_type = #tpu.core_type<tc>, window_params = [{transform_indices = @transform_0, window_bounds = array<i64: 16, 32>}, {pipeline_mode = #tpu.pipeline_mode<synchronous>, transform_indices = @transform_1, window_bounds = array<i64: 32, 128>}, {pipeline_mode = #tpu.pipeline_mode<synchronous>, transform_indices = @transform_2, window_bounds = array<i64: 1, 128>}, {transform_indices = @transform_3, window_bounds = array<i64: 16, 128>}]} {
    %c0 = arith.constant 0 : index
    %c0_0 = arith.constant 0 : index
    %0 = vector.load %arg2[%c0, %c0_0] : memref<16x32xf32, #tpu.memory_space<vmem>>, vector<16x32xf32>
    %cst = arith.constant 0.000000e+00 : f32
    %1 = vector.broadcast %cst : f32 to vector<16x32xf32>
    %cst_1 = arith.constant 1.000000e+00 : f32
    %2 = vector.broadcast %cst_1 : f32 to vector<16x32xf32>
    %3 = arith.addf %1, %2 : vector<16x32xf32>
    %cst_2 = arith.constant 1.000000e+00 : f32
    %4 = vector.broadcast %cst_2 : f32 to vector<16x32xf32>
    %5 = arith.addf %3, %4 : vector<16x32xf32>
    %cst_3 = arith.constant 1.000000e+00 : f32
    %6 = vector.broadcast %cst_3 : f32 to vector<16x32xf32>
    %7 = arith.addf %5, %6 : vector<16x32xf32>
    %cst_4 = arith.constant 0.333333343 : f32
    %8 = vector.broadcast %cst_4 : f32 to vector<16x32xf32>
    %9 = arith.mulf %7, %8 : vector<16x32xf32>
    %10 = arith.mulf %0, %9 : vector<16x32xf32>
    %c0_5 = arith.constant 0 : index
    %c0_6 = arith.constant 0 : index
    %11 = vector.load %arg3[%c0_5, %c0_6] : memref<32x128xf32, #tpu.memory_space<vmem>>, vector<32x128xf32>
    %cst_7 = arith.constant dense<0.000000e+00> : vector<16x128xf32>
    %12 = tpu.matmul %10, %11, %cst_7 {dimension_numbers = #tpu.dot_dimension_numbers<[1], [0], [0], [1], [0, 0, 1, 1], [], []>} : vector<16x32xf32>, vector<32x128xf32>, vector<16x128xf32> -> vector<16x128xf32>
    %c0_8 = arith.constant 0 : index
    %c0_9 = arith.constant 0 : index
    %13 = vector.load %arg4[%c0_8, %c0_9] : memref<1x128xf32, #tpu.memory_space<vmem>>, vector<1x128xf32>
    %14 = vector.broadcast %13 : vector<1x128xf32> to vector<16x128xf32>
    %15 = arith.addf %12, %14 : vector<16x128xf32>
    %c0_10 = arith.constant 0 : index
    %c0_11 = arith.constant 0 : index
    %16 = vector.load %arg5[%c0_10, %c0_11] : memref<16x128xf32, #tpu.memory_space<vmem>>, vector<16x128xf32>
    tpu.vector_store %arg5[%c0_10, %c0_11], %15 {strides = array<i32>} : memref<16x128xf32, #tpu.memory_space<vmem>>, vector<16x128xf32>,
    return
  }
  func.func @transform_0(%arg0: i32, %arg1: memref<1xi32, #tpu.memory_space<smem>>) -> (i32, i32) {
    %c0_i32 = arith.constant 0 : i32
    %c0_i32_0 = arith.constant 0 : i32
    return %arg0, %c0_i32 : i32, i32
  }
  func.func @transform_1(%arg0: i32, %arg1: memref<1xi32, #tpu.memory_space<smem>>) -> (i32, i32) {
    %c0_i32 = arith.constant 0 : i32
    %c0_i32_0 = arith.constant 0 : i32
    %c0_i32_1 = arith.constant 0 : i32
    return %c0_i32, %c0_i32_0 : i32, i32
  }
  func.func @transform_2(%arg0: i32, %arg1: memref<1xi32, #tpu.memory_space<smem>>) -> (i32, i32) {
    %c0_i32 = arith.constant 0 : i32
    %c0_i32_0 = arith.constant 0 : i32
    %c0_i32_1 = arith.constant 0 : i32
    return %c0_i32, %c0_i32_0 : i32, i32
  }
  func.func @transform_3(%arg0: i32, %arg1: memref<1xi32, #tpu.memory_space<smem>>) -> (i32, i32) {
    %c0_i32 = arith.constant 0 : i32
    %c0_i32_0 = arith.constant 0 : i32
    return %arg0, %c0_i32 : i32, i32
  }
}

</mosaic_0001>

<llo_original>
// kernel: tpu_custom_call.1
$region0: #{tpu_custom_call.1}
  #allocation0 [shape = 'u32[]', space=smem, size = 0x4, offset = 0x4, fixed_abs, tag = 'smem constant byte address 0x4 - core index']
  #allocation1 [shape = 'u32[144,128]{1,0:T(1,128)}', space=vmem, size = 0x12000, scoped, tag = 'internal scratch']
  #allocation2 [shape = 's32[1]{0}', space=sflag, size = 0x4, scoped, tag = 'scoped memory for tpu_custom_call.1']
  #allocation3 [shape = 's32[1]{0:T(128)S(6)}', space=smem, size = 0x200, scoped, tag = 'prefetched SMEM operand 0']
  %s0 = inlined_call_operand.<no memory space> [shape: s32[1], index: 0, kind: input, shape index: {}]
  %s1 = inlined_call_operand.hbm [shape: f32[16,32], index: 1, kind: input, shape index: {}]
  %s2 = inlined_call_operand.hbm [shape: f32[32,128], index: 2, kind: input, shape index: {}]
  %s3 = inlined_call_operand.vmem [shape: f32[1,128], index: 3, kind: input, shape index: {}]
  %s4 = inlined_call_operand.hbm [shape: f32[16,128], index: 4, kind: output, shape index: {}]
  %s5 = sld [smem:[#allocation0]]
  $region30: #{tpu_custom_call.1} parent=0
    _
  %s7 = ssub.s32 1, %s5
  %s8 = scalar_select 0, %s7, %s5
  %9 = sst [smem:[#allocation3]] %s0
  $region1: #{tpu_custom_call.1} parent=0
    #allocation4 [shape = 'u8[8192]{0}', space=vmem, size = 0x2000, scoped, tag = 'input window, operand 1, single buffered']
    #allocation5 [shape = 's32[1]{0}', space=sflag, size = 0x4, scoped, tag = 'scoped memory for tpu_custom_call.1']
    #allocation6 [shape = 's32[1]{0}', space=sflag, size = 0x4, scoped, tag = 'scoped memory for tpu_custom_call.1']
    #allocation7 [shape = 'u8[16384]{0}', space=vmem, size = 0x4000, scoped, tag = 'input window, operand 2, single buffered']
    #allocation8 [shape = 's32[1]{0}', space=sflag, size = 0x4, scoped, tag = 'scoped memory for tpu_custom_call.1']
    #allocation9 [shape = 'u8[8192]{0}', space=vmem, size = 0x2000, scoped, tag = 'output window, operand 0, single buffered']
    %10 = vsyncpa [#allocation5], 0
    %11 = vsyncpa [#allocation8], 0
    %12 = vsyncpa [#allocation6], 0
    // Predicated region
    $region2: #{tpu_custom_call.1} parent=1 // pred_check
      _
    $region3: #{tpu_custom_call.1} parent=1 // pred_check_branch
      %14 = sbr.rel (0) target = $region5
    $region4: #{tpu_custom_call.1} parent=1 // pred_region
      %s16 = ssub.s32 256, 256
      %17 = vsyncadd [#allocation5], %s16
      %s18 = sshll.u32 [#allocation4], 4
      %s19 = int_to_ptr.vmem [resolvable:$true] %s18
      %24 = dma.hbm_to_vmem [thread:$0]  %s1, 256, %s19, [#allocation5], 128, 128, 8
    $region5: #{tpu_custom_call.1} parent=1 // pred_fallthru
      _
    // Predicated region
    $region6: #{tpu_custom_call.1} parent=1 // pred_check
      _
    $region7: #{tpu_custom_call.1} parent=1 // pred_check_branch
      %26 = sbr.rel (0) target = $region9
    $region8: #{tpu_custom_call.1} parent=1 // pred_region
      %s28 = ssub.s32 512, 512
      %29 = vsyncadd [#allocation8], %s28
      %s30 = sshll.u32 [#allocation7], 4
      %s31 = int_to_ptr.vmem [resolvable:$true] %s30
      %36 = dma.hbm_to_vmem [thread:$0]  %s2, 512, %s31, [#allocation8], 128, 128, 8
    $region9: #{tpu_custom_call.1} parent=1 // pred_fallthru
      _
    // Predicated region
    $region10: #{tpu_custom_call.1} parent=1 // pred_check
      _
    $region11: #{tpu_custom_call.1} parent=1 // pred_check_branch
      %38 = sbr.rel (0) target = $region13
    $region12: #{tpu_custom_call.1} parent=1 // pred_region
      _
    $region13: #{tpu_custom_call.1} parent=1 // pred_fallthru
      _
    // Predicated region
    $region14: #{tpu_custom_call.1} parent=1 // pred_check
      _
    $region15: #{tpu_custom_call.1} parent=1 // pred_check_branch
      %40 = sbr.rel (0) target = $region17
    $region16: #{tpu_custom_call.1} parent=1 // pred_region
      %41 = dma.done [#allocation5], 256
    $region17: #{tpu_custom_call.1} parent=1 // pred_fallthru
      _
    // Predicated region
    $region18: #{tpu_custom_call.1} parent=1 // pred_check
      _
    $region19: #{tpu_custom_call.1} parent=1 // pred_check_branch
      %43 = sbr.rel (0) target = $region21
    $region20: #{tpu_custom_call.1} parent=1 // pred_region
      %44 = dma.done [#allocation8], 512
    $region21: #{tpu_custom_call.1} parent=1 // pred_fallthru
      _
    %v45 = vld [vmem:[#allocation4] sm:$0xff]
    %v46 = vld [vmem:[#allocation4 + $0x8] sm:$0xff]
    %v47 = vld [vmem:[#allocation7] sm:$0xff]
    %v48 = vld [vmem:[#allocation7 + $0x8] sm:$0xff]
    %v49 = vld [vmem:[#allocation7 + $0x10] sm:$0xff]
    %v50 = vld [vmem:[#allocation7 + $0x18] sm:$0xff]
    %v51 = vld [vmem:[%s3] sm:$0x1]
    %v53 = vlaneseq
    %v54 = vshrl.u32 %v53, 7
    %v55 = vsub.s32 0, %v54
    %v56 = vrot.slane %v51, %v55
    %vm58 = vcmask 261120
    %v60 = vsel %vm58, %v45, 0
    %v63 = vsel %vm58, %v46, 0
    %65 = vmatprep.subr.mxu0 0.0
    %66 = vmatpush1.msra.mxu0 %v47
    %67 = vmatprep.subr.mxu0 0.0
    %68 = vmatpush1.msra.mxu0 %v48
    %69 = vmatprep.subr.mxu0 0.0
    %70 = vmatpush1.msra.mxu0 %v49
    %71 = vmatprep.subr.mxu0 0.0
    %72 = vmatpush1.msra.mxu0 %v50
    %73 = vmatprep.subr.mxu0 0.0
    %74 = vmatpush1.msra.mxu0 0.0
    %75 = vmatprep.subr.mxu0 0.0
    %76 = vmatpush1.msra.mxu0 0.0
    %77 = vmatprep.subr.mxu0 0.0
    %78 = vmatpush1.msra.mxu0 0.0
    %79 = vmatprep.subr.mxu0 0.0
    %80 = vmatpush1.msra.mxu0 0.0
    %81 = vmatprep.subr.mxu0 0.0
    %82 = vmatpush1.msra.mxu0 0.0
    %83 = vmatprep.subr.mxu0 0.0
    %84 = vmatpush1.msra.mxu0 0.0
    %85 = vmatprep.subr.mxu0 0.0
    %86 = vmatpush1.msra.mxu0 0.0
    %87 = vmatprep.subr.mxu0 0.0
    %88 = vmatpush1.msra.mxu0 0.0
    %89 = vmatprep.subr.mxu0 0.0
    %90 = vmatpush1.msra.mxu0 0.0
    %91 = vmatprep.subr.mxu0 0.0
    %92 = vmatpush1.msra.mxu0 0.0
    %93 = vmatprep.subr.mxu0 0.0
    %94 = vmatpush1.msra.mxu0 0.0
    %95 = vmatprep.subr.mxu0 0.0
    %96 = vmatpush1.msra.mxu0 0.0
    %97 = vmatprep.subr.mxu0 0.0
    %98 = vmatpush1.msra.mxu0 0.0
    %99 = vmatprep.subr.mxu0 0.0
    %100 = vmatpush1.msra.mxu0 0.0
    %101 = vmatprep.subr.mxu0 0.0
    %102 = vmatpush1.msra.mxu0 0.0
    %103 = vmatprep.subr.mxu0 0.0
    %104 = vmatpush1.msra.mxu0 0.0
    %105 = vmatprep.subr.mxu0 0.0
    %106 = vmatpush1.msra.mxu0 0.0
    %107 = vmatprep.subr.mxu0 0.0
    %108 = vmatpush1.msra.mxu0 0.0
    %109 = vmatprep.subr.mxu0 0.0
    %110 = vmatpush1.msra.mxu0 0.0
    %111 = vmatprep.subr.mxu0 0.0
    %112 = vmatpush1.msra.mxu0 0.0
    %113 = vmatprep.subr.mxu0 0.0
    %114 = vmatpush1.msra.mxu0 0.0
    %115 = vmatprep.subr.mxu0 0.0
    %116 = vmatpush1.msra.mxu0 0.0
    %117 = vmatprep.subr.mxu0 0.0
    %118 = vmatpush1.msra.mxu0 0.0
    %119 = vmatprep.subr.mxu0 0.0
    %120 = vmatpush1.msra.mxu0 0.0
    %121 = vmatprep.subr.mxu0 0.0
    %122 = vmatpush1.msra.mxu0 0.0
    %123 = vmatprep.subr.mxu0 0.0
    %124 = vmatpush1.msra.mxu0 0.0
    %125 = vmatprep.subr.mxu0 0.0
    %126 = vmatpush1.msra.mxu0 0.0
    %127 = vmatprep.subr.mxu0 0.0
    %128 = vmatpush1.msra.mxu0 0.0
    %129 = vmatprep.mubr.f32.mxu0 0.0
    %130 = vmatmul.mubr.f32.gmra.mrb[0].mxu0 %v60
    %v131 = vpop.f32.mrb[0].mxu0
    %v132 = vadd.f32 %v56, %v131
    %v133 = vpop.f32.mrb[0].mxu0
    %134 = vmatprep.mubr.f32.mxu0 0.0
    %135 = vmatmul.mubr.f32.gmra.mrb[0].mxu0 %v63
    %v136 = vpop.f32.mrb[0].mxu0
    %v137 = vadd.f32 %v56, %v136
    %v138 = vpop.f32.mrb[0].mxu0
    %139 = vdwg.mxu0
    %140 = vst [vmem:[#allocation9] sm:$0xff] %v132
    %141 = vst [vmem:[#allocation9 + $0x8] sm:$0xff] %v137
    // Predicated region
    $region22: #{tpu_custom_call.1} parent=1 // pred_check
      _
    $region23: #{tpu_custom_call.1} parent=1 // pred_check_branch
      %143 = sbr.rel (0) target = $region25
    $region24: #{tpu_custom_call.1} parent=1 // pred_region
      %s145 = ssub.s32 256, 256
      %146 = vsyncadd [#allocation6], %s145
      %s147 = sshll.u32 [#allocation9], 4
      %s148 = int_to_ptr.vmem [resolvable:$true] %s147
      %153 = dma.vmem_to_hbm [thread:$0]  %s148, 256, %s4, [#allocation6], 128, 128, 8
    $region25: #{tpu_custom_call.1} parent=1 // pred_fallthru
      _
    // Predicated region
    $region26: #{tpu_custom_call.1} parent=1 // pred_check
      _
    $region27: #{tpu_custom_call.1} parent=1 // pred_check_branch
      %155 = sbr.rel (0) target = $region29
    $region28: #{tpu_custom_call.1} parent=1 // pred_region
      %156 = dma.done [#allocation6], 256
    $region29: #{tpu_custom_call.1} parent=1 // pred_fallthru
      _
    %157 = vsyncpa [#allocation5], 1
    %158 = vsyncpa [#allocation8], 1
    %159 = vsyncpa [#allocation6], 1

</llo_original>
